<compile_context>
chip_gen: v5e
topology: v5e:2x2
jax: 0.10.0
libtpu: 0.0.40
codegen_flags: <defaults>
</compile_context>

<pallas_src>
import jax
import jax.numpy as jnp
from jax.experimental import pallas as pl
from jax.experimental.pallas import tpu as pltpu  # noqa: F401  (TPU backend target)

# ---- model hyperparameters (small, consistent with the module's forward) ----
B, S, T = 2, 4, 32            # batch, EEG channels (conv "height"), time samples
F1, T1 = 8, 8                 # temporal filters, temporal kernel length
F2 = 8                        # spatial filters
P1_T, P1_S = 4, 2             # pooling kernel / stride along time (pool_mode="mean")
N_CLASSES = 3
BN_EPS = 1e-5
LOG_EPS = 1e-6

T_CONV = T - T1 + 1                      # 25  (valid conv over time)
T_POOL = (T_CONV - P1_T) // P1_S + 1     # 11
LAST_DIM = F2 * T_POOL                   # 88


def _shallow_kernel(x_ref, wf_ref, bf_ref, pool_ref, wl_ref, bl_ref, o_ref):
    """Whole-batch fused forward.

    x_ref:    (B, S, T)                input
    wf_ref:   (T1, F2, S)              fused conv1*conv2*BN per-tap weights
    bf_ref:   (F2, 1)                  fused bias (conv1 bias through conv2 + BN shift)
    pool_ref: (T_CONV, T_POOL)         mean-pool matrix
    wl_ref:   (F2, T_POOL, N_CLASSES)  linear weight in (F2, T_POOL) layout (no flatten)
    bl_ref:   (1, N_CLASSES)           linear bias
    o_ref:    (B, N_CLASSES)           logits
    """
    x = x_ref[...]                              # (B, S, T)
    bf = bf_ref[...]                            # (F2, 1)
    pool = pool_ref[...]                        # (T_CONV, T_POOL)
    bl = bl_ref[...]                            # (1, N_CLASSES)

    # Hoist weight loads out of the (static, tiny) batch loop.
    wf_taps = [wf_ref[k] for k in range(T1)]    # each (F2, S)
    wl_slabs = [wl_ref[f] for f in range(F2)]   # each (T_POOL, N_CLASSES)

    for b in range(B):                          # static unroll; B is tiny
        xb = x[b]                               # (S, T)

        # Fused temporal*spatial*BN conv: T1 accumulating MXU taps on static
        # lane slices.  h[f2, tt] = sum_k sum_s wf[k,f2,s] * x[s, tt+k] + bf[f2]
        h = jnp.dot(wf_taps[0], xb[:, 0:T_CONV],
                    preferred_element_type=jnp.float32)          # (F2, T_CONV)
        for k in range(1, T1):
            h = h + jnp.dot(wf_taps[k], xb[:, k:k + T_CONV],
                            preferred_element_type=jnp.float32)
        h = h + bf                                               # fused bias/BN shift
        h = h * h                                                # ActSquare

        # Mean pooling over time as one matmul.
        p = jnp.dot(h, pool, preferred_element_type=jnp.float32)  # (F2, T_POOL)
        p = jnp.log(jnp.maximum(p, LOG_EPS))                       # ActLog

        # Dropout is identity at inference.
        # Linear without flatten: contract (F2, T_POOL) against (F2, T_POOL, C)
        # as F2 small (1,T_POOL)@(T_POOL,C) matmuls (no cross-sublane relayout).
        acc = jnp.dot(p[0:1, :], wl_slabs[0],
                      preferred_element_type=jnp.float32)          # (1, N_CLASSES)
        for f in range(1, F2):
            acc = acc + jnp.dot(p[f:f + 1, :], wl_slabs[f],
                                preferred_element_type=jnp.float32)
        o_ref[b:b + 1, :] = acc + bl


def shallow_convnet_forward(x, params):
    """x: (B, 1, S, T) float32 (PyTorch NCHW). Returns (B, N_CLASSES) logits."""
    x3 = x.reshape(B, S, T).astype(jnp.float32)
    wf, bf, pool_mat, wl3, bl = params
    # Single invocation, no grid: every operand is a full-array VMEM block
    # (total working set < 8 KiB), so there is no pipeline to tune.
    return pl.pallas_call(
        _shallow_kernel,
        out_shape=jax.ShapeDtypeStruct((B, N_CLASSES), jnp.float32),
    )(x3, wf, bf, pool_mat, wl3, bl)


# ---------------------------------------------------------------------------
# Parameter construction (host side): raw PyTorch-style params + exact fusion.
# ---------------------------------------------------------------------------
def _renorm(w, maxnorm):
    # torch.renorm(w, p=2, dim=0, maxnorm): clamp L2 norm of every dim-0 slice.
    flat = w.reshape(w.shape[0], -1)
    norms = jnp.sqrt(jnp.sum(flat * flat, axis=1, keepdims=True))
    scale = jnp.where(norms > maxnorm, maxnorm / (norms + 1e-7), 1.0)
    return (flat * scale).reshape(w.shape)


def init_raw_params(key):
    ks = jax.random.split(key, 7)
    w1 = 0.1 * jax.random.normal(ks[0], (F1, 1, 1, T1), jnp.float32)   # Conv1 weight
    b1 = 0.1 * jax.random.normal(ks[1], (F1,), jnp.float32)            # Conv1 bias
    w2 = 0.1 * jax.random.normal(ks[2], (F2, F1, S, 1), jnp.float32)   # Conv2 weight (no bias)
    gamma = 1.0 + 0.1 * jax.random.normal(ks[3], (F2,), jnp.float32)   # BN affine
    beta = 0.1 * jax.random.normal(ks[4], (F2,), jnp.float32)
    rmean = jnp.zeros((F2,), jnp.float32)                              # BN running stats (eval)
    rvar = jnp.ones((F2,), jnp.float32)
    wl = 0.1 * jax.random.normal(ks[5], (N_CLASSES, LAST_DIM), jnp.float32)
    bl = 0.1 * jax.random.normal(ks[6], (N_CLASSES,), jnp.float32)

    # max-norm constraints of the *WithConstraint layers (applied once here;
    # inference semantics — the PyTorch hook would re-apply every forward).
    w1 = _renorm(w1, 2.0)
    w2 = _renorm(w2, 2.0)
    wl = _renorm(wl, 0.5)
    return (w1, b1, w2, gamma, beta, rmean, rvar, wl, bl)


def fuse_params(raw):
    """Exact fusion of conv1+conv2+BN and layout prep for the kernel."""
    w1, b1, w2, gamma, beta, rmean, rvar, wl, bl = raw
    w1m = w1.reshape(F1, T1)
    w2m = w2.reshape(F2, F1, S)

    bn_scale = gamma / jnp.sqrt(rvar + BN_EPS)
    bn_shift = beta - rmean * bn_scale

    # wf[k, f2, s] = bn_scale[f2] * sum_f1 w2[f2,f1,s] * w1[f1,k]
    wf = jnp.einsum('gfs,fk->kgs', w2m, w1m) * bn_scale[None, :, None]   # (T1, F2, S)
    # bf[f2] = bn_scale[f2] * sum_{f1,s} w2[f2,f1,s]*b1[f1] + bn_shift[f2]
    bf = bn_scale * jnp.einsum('gfs,f->g', w2m, b1) + bn_shift           # (F2,)

    # mean-pool matrix: pool_mat[tt, p] = 1/P1_T iff tt is inside pooling window p
    idx_t = jnp.arange(T_CONV)[:, None]
    idx_p = jnp.arange(T_POOL)[None, :]
    pool_mat = jnp.where(
        (idx_t >= idx_p * P1_S) & (idx_t < idx_p * P1_S + P1_T),
        jnp.float32(1.0 / P1_T), jnp.float32(0.0))                       # (T_CONV, T_POOL)

    # Linear weight in (F2, T_POOL, N_CLASSES) layout so the kernel never
    # flattens: wl3[f, p, c] == wl[c, f*T_POOL + p]  (PyTorch Flatten order).
    wl3 = wl.reshape(N_CLASSES, F2, T_POOL).transpose(1, 2, 0)

    return (wf.astype(jnp.float32),
            bf.reshape(F2, 1).astype(jnp.float32),
            pool_mat.astype(jnp.float32),
            wl3.astype(jnp.float32),
            bl.reshape(1, N_CLASSES).astype(jnp.float32))


# ---------------------------------------------------------------------------
# Pure-JAX reference of the original (unfused) PyTorch pipeline, for checking.
# ---------------------------------------------------------------------------
def reference_forward(x, raw):
    w1, b1, w2, gamma, beta, rmean, rvar, wl, bl = raw
    xs = x.reshape(B, S, T).astype(jnp.float32)
    # Conv2d(1->F1, (1,T1)) with bias
    wins = jnp.stack([xs[:, :, k:k + T_CONV] for k in range(T1)], axis=-1)   # (B,S,Tc,T1)
    h1 = jnp.einsum('bstk,fk->bfst', wins, w1.reshape(F1, T1)) + b1[None, :, None, None]
    # Conv2d(F1->F2, (S,1)), no bias
    h2 = jnp.einsum('bfst,gfs->bgt', h1, w2.reshape(F2, F1, S))              # (B,F2,Tc)
    # BatchNorm2d (eval)
    h2 = (h2 - rmean[None, :, None]) / jnp.sqrt(rvar[None, :, None] + BN_EPS)
    h2 = h2 * gamma[None, :, None] + beta[None, :, None]
    # square -> mean pool -> log
    h2 = h2 * h2
    pooled = jnp.stack([h2[:, :, p * P1_S:p * P1_S + P1_T].mean(-1)
                        for p in range(T_POOL)], axis=-1)                    # (B,F2,Tp)
    feat = jnp.log(jnp.maximum(pooled, LOG_EPS)).reshape(B, LAST_DIM)
    # Dropout identity -> Flatten -> Linear
    return feat @ wl.T + bl[None, :]


if __name__ == "__main__":
    key = jax.random.PRNGKey(0)
    kx, kp = jax.random.split(key)
    x = jax.random.normal(kx, (B, 1, S, T), jnp.float32)   # NCHW, like the PyTorch module
    raw = init_raw_params(kp)
    params = fuse_params(raw)

    out = shallow_convnet_forward(x, params)
    out = jax.block_until_ready(out)

    ref = reference_forward(x, raw)
    assert out.shape == (B, N_CLASSES)
    assert bool(jnp.all(jnp.isfinite(out)))
    assert bool(jnp.allclose(out, ref, rtol=1e-3, atol=1e-3)), (out, ref)
    print("KERNEL_OK")
</pallas_src>

<mosaic_0001>
module attributes {stable_mosaic.version = 11 : i64} {
  func.func @_shallow_kernel(%arg0: memref<2x4x32xf32, #tpu.memory_space<vmem>>, %arg1: memref<8x8x4xf32, #tpu.memory_space<vmem>>, %arg2: memref<8x1xf32, #tpu.memory_space<vmem>>, %arg3: memref<25x11xf32, #tpu.memory_space<vmem>>, %arg4: memref<8x11x3xf32, #tpu.memory_space<vmem>>, %arg5: memref<1x3xf32, #tpu.memory_space<vmem>>, %arg6: memref<2x3xf32, #tpu.memory_space<vmem>>) attributes {dimension_semantics = [], scalar_prefetch = 0 : i64, scratch_operands = 0 : i64, tpu.core_type = #tpu.core_type<tc>} {
    %c0 = arith.constant 0 : index
    %c0_0 = arith.constant 0 : index
    %c0_1 = arith.constant 0 : index
    %0 = vector.load %arg0[%c0, %c0_0, %c0_1] : memref<2x4x32xf32, #tpu.memory_space<vmem>>, vector<2x4x32xf32>
    %c0_2 = arith.constant 0 : index
    %c0_3 = arith.constant 0 : index
    %1 = vector.load %arg2[%c0_2, %c0_3] : memref<8x1xf32, #tpu.memory_space<vmem>>, vector<8x1xf32>
    %c0_4 = arith.constant 0 : index
    %c0_5 = arith.constant 0 : index
    %2 = vector.load %arg3[%c0_4, %c0_5] : memref<25x11xf32, #tpu.memory_space<vmem>>, vector<25x11xf32>
    %c0_6 = arith.constant 0 : index
    %c0_7 = arith.constant 0 : index
    %3 = vector.load %arg5[%c0_6, %c0_7] : memref<1x3xf32, #tpu.memory_space<vmem>>, vector<1x3xf32>
    %c0_8 = arith.constant 0 : index
    %c0_9 = arith.constant 0 : index
    %c0_10 = arith.constant 0 : index
    %4 = vector.load %arg1[%c0_8, %c0_9, %c0_10] : memref<8x8x4xf32, #tpu.memory_space<vmem>>, vector<1x8x4xf32>
    %5 = vector.shape_cast %4 : vector<1x8x4xf32> to vector<8x4xf32>
    %c1 = arith.constant 1 : index
    %c0_11 = arith.constant 0 : index
    %c0_12 = arith.constant 0 : index
    %6 = vector.load %arg1[%c1, %c0_11, %c0_12] : memref<8x8x4xf32, #tpu.memory_space<vmem>>, vector<1x8x4xf32>
    %7 = vector.shape_cast %6 : vector<1x8x4xf32> to vector<8x4xf32>
    %c2 = arith.constant 2 : index
    %c0_13 = arith.constant 0 : index
    %c0_14 = arith.constant 0 : index
    %8 = vector.load %arg1[%c2, %c0_13, %c0_14] : memref<8x8x4xf32, #tpu.memory_space<vmem>>, vector<1x8x4xf32>
    %9 = vector.shape_cast %8 : vector<1x8x4xf32> to vector<8x4xf32>
    %c3 = arith.constant 3 : index
    %c0_15 = arith.constant 0 : index
    %c0_16 = arith.constant 0 : index
    %10 = vector.load %arg1[%c3, %c0_15, %c0_16] : memref<8x8x4xf32, #tpu.memory_space<vmem>>, vector<1x8x4xf32>
    %11 = vector.shape_cast %10 : vector<1x8x4xf32> to vector<8x4xf32>
    %c4 = arith.constant 4 : index
    %c0_17 = arith.constant 0 : index
    %c0_18 = arith.constant 0 : index
    %12 = vector.load %arg1[%c4, %c0_17, %c0_18] : memref<8x8x4xf32, #tpu.memory_space<vmem>>, vector<1x8x4xf32>
    %13 = vector.shape_cast %12 : vector<1x8x4xf32> to vector<8x4xf32>
    %c5 = arith.constant 5 : index
    %c0_19 = arith.constant 0 : index
    %c0_20 = arith.constant 0 : index
    %14 = vector.load %arg1[%c5, %c0_19, %c0_20] : memref<8x8x4xf32, #tpu.memory_space<vmem>>, vector<1x8x4xf32>
    %15 = vector.shape_cast %14 : vector<1x8x4xf32> to vector<8x4xf32>
    %c6 = arith.constant 6 : index
    %c0_21 = arith.constant 0 : index
    %c0_22 = arith.constant 0 : index
    %16 = vector.load %arg1[%c6, %c0_21, %c0_22] : memref<8x8x4xf32, #tpu.memory_space<vmem>>, vector<1x8x4xf32>
    %17 = vector.shape_cast %16 : vector<1x8x4xf32> to vector<8x4xf32>
    %c7 = arith.constant 7 : index
    %c0_23 = arith.constant 0 : index
    %c0_24 = arith.constant 0 : index
    %18 = vector.load %arg1[%c7, %c0_23, %c0_24] : memref<8x8x4xf32, #tpu.memory_space<vmem>>, vector<1x8x4xf32>
    %19 = vector.shape_cast %18 : vector<1x8x4xf32> to vector<8x4xf32>
    %c0_25 = arith.constant 0 : index
    %c0_26 = arith.constant 0 : index
    %c0_27 = arith.constant 0 : index
    %20 = vector.load %arg4[%c0_25, %c0_26, %c0_27] : memref<8x11x3xf32, #tpu.memory_space<vmem>>, vector<1x11x3xf32>
    %21 = vector.shape_cast %20 : vector<1x11x3xf32> to vector<11x3xf32>
    %c1_28 = arith.constant 1 : index
    %c0_29 = arith.constant 0 : index
    %c0_30 = arith.constant 0 : index
    %22 = vector.load %arg4[%c1_28, %c0_29, %c0_30] : memref<8x11x3xf32, #tpu.memory_space<vmem>>, vector<1x11x3xf32>
    %23 = vector.shape_cast %22 : vector<1x11x3xf32> to vector<11x3xf32>
    %c2_31 = arith.constant 2 : index
    %c0_32 = arith.constant 0 : index
    %c0_33 = arith.constant 0 : index
    %24 = vector.load %arg4[%c2_31, %c0_32, %c0_33] : memref<8x11x3xf32, #tpu.memory_space<vmem>>, vector<1x11x3xf32>
    %25 = vector.shape_cast %24 : vector<1x11x3xf32> to vector<11x3xf32>
    %c3_34 = arith.constant 3 : index
    %c0_35 = arith.constant 0 : index
    %c0_36 = arith.constant 0 : index
    %26 = vector.load %arg4[%c3_34, %c0_35, %c0_36] : memref<8x11x3xf32, #tpu.memory_space<vmem>>, vector<1x11x3xf32>
    %27 = vector.shape_cast %26 : vector<1x11x3xf32> to vector<11x3xf32>
    %c4_37 = arith.constant 4 : index
    %c0_38 = arith.constant 0 : index
    %c0_39 = arith.constant 0 : index
    %28 = vector.load %arg4[%c4_37, %c0_38, %c0_39] : memref<8x11x3xf32, #tpu.memory_space<vmem>>, vector<1x11x3xf32>
    %29 = vector.shape_cast %28 : vector<1x11x3xf32> to vector<11x3xf32>
    %c5_40 = arith.constant 5 : index
    %c0_41 = arith.constant 0 : index
    %c0_42 = arith.constant 0 : index
    %30 = vector.load %arg4[%c5_40, %c0_41, %c0_42] : memref<8x11x3xf32, #tpu.memory_space<vmem>>, vector<1x11x3xf32>
    %31 = vector.shape_cast %30 : vector<1x11x3xf32> to vector<11x3xf32>
    %c6_43 = arith.constant 6 : index
    %c0_44 = arith.constant 0 : index
    %c0_45 = arith.constant 0 : index
    %32 = vector.load %arg4[%c6_43, %c0_44, %c0_45] : memref<8x11x3xf32, #tpu.memory_space<vmem>>, vector<1x11x3xf32>
    %33 = vector.shape_cast %32 : vector<1x11x3xf32> to vector<11x3xf32>
    %c7_46 = arith.constant 7 : index
    %c0_47 = arith.constant 0 : index
    %c0_48 = arith.constant 0 : index
    %34 = vector.load %arg4[%c7_46, %c0_47, %c0_48] : memref<8x11x3xf32, #tpu.memory_space<vmem>>, vector<1x11x3xf32>
    %35 = vector.shape_cast %34 : vector<1x11x3xf32> to vector<11x3xf32>
    %36 = vector.extract_strided_slice %0 {offsets = [0, 0, 0], sizes = [1, 4, 32], strides = [1, 1, 1]} : vector<2x4x32xf32> to vector<1x4x32xf32>
    %37 = vector.shape_cast %36 : vector<1x4x32xf32> to vector<4x32xf32>
    %38 = vector.extract_strided_slice %37 {offsets = [0, 0], sizes = [4, 25], strides = [1, 1]} : vector<4x32xf32> to vector<4x25xf32>
    %cst = arith.constant dense<0.000000e+00> : vector<8x25xf32>
    %39 = tpu.matmul %5, %38, %cst {dimension_numbers = #tpu.dot_dimension_numbers<[1], [0], [0], [1], [0, 0, 1, 1], [], []>} : vector<8x4xf32>, vector<4x25xf32>, vector<8x25xf32> -> vector<8x25xf32>
    %40 = vector.extract_strided_slice %37 {offsets = [0, 1], sizes = [4, 25], strides = [1, 1]} : vector<4x32xf32> to vector<4x25xf32>
    %cst_49 = arith.constant dense<0.000000e+00> : vector<8x25xf32>
    %41 = tpu.matmul %7, %40, %cst_49 {dimension_numbers = #tpu.dot_dimension_numbers<[1], [0], [0], [1], [0, 0, 1, 1], [], []>} : vector<8x4xf32>, vector<4x25xf32>, vector<8x25xf32> -> vector<8x25xf32>
    %42 = arith.addf %39, %41 : vector<8x25xf32>
    %43 = vector.extract_strided_slice %37 {offsets = [0, 2], sizes = [4, 25], strides = [1, 1]} : vector<4x32xf32> to vector<4x25xf32>
    %cst_50 = arith.constant dense<0.000000e+00> : vector<8x25xf32>
    %44 = tpu.matmul %9, %43, %cst_50 {dimension_numbers = #tpu.dot_dimension_numbers<[1], [0], [0], [1], [0, 0, 1, 1], [], []>} : vector<8x4xf32>, vector<4x25xf32>, vector<8x25xf32> -> vector<8x25xf32>
    %45 = arith.addf %42, %44 : vector<8x25xf32>
    %46 = vector.extract_strided_slice %37 {offsets = [0, 3], sizes = [4, 25], strides = [1, 1]} : vector<4x32xf32> to vector<4x25xf32>
    %cst_51 = arith.constant dense<0.000000e+00> : vector<8x25xf32>
    %47 = tpu.matmul %11, %46, %cst_51 {dimension_numbers = #tpu.dot_dimension_numbers<[1], [0], [0], [1], [0, 0, 1, 1], [], []>} : vector<8x4xf32>, vector<4x25xf32>, vector<8x25xf32> -> vector<8x25xf32>
    %48 = arith.addf %45, %47 : vector<8x25xf32>
    %49 = vector.extract_strided_slice %37 {offsets = [0, 4], sizes = [4, 25], strides = [1, 1]} : vector<4x32xf32> to vector<4x25xf32>
    %cst_52 = arith.constant dense<0.000000e+00> : vector<8x25xf32>
    %50 = tpu.matmul %13, %49, %cst_52 {dimension_numbers = #tpu.dot_dimension_numbers<[1], [0], [0], [1], [0, 0, 1, 1], [], []>} : vector<8x4xf32>, vector<4x25xf32>, vector<8x25xf32> -> vector<8x25xf32>
    %51 = arith.addf %48, %50 : vector<8x25xf32>
    %52 = vector.extract_strided_slice %37 {offsets = [0, 5], sizes = [4, 25], strides = [1, 1]} : vector<4x32xf32> to vector<4x25xf32>
    %cst_53 = arith.constant dense<0.000000e+00> : vector<8x25xf32>
    %53 = tpu.matmul %15, %52, %cst_53 {dimension_numbers = #tpu.dot_dimension_numbers<[1], [0], [0], [1], [0, 0, 1, 1], [], []>} : vector<8x4xf32>, vector<4x25xf32>, vector<8x25xf32> -> vector<8x25xf32>
    %54 = arith.addf %51, %53 : vector<8x25xf32>
    %55 = vector.extract_strided_slice %37 {offsets = [0, 6], sizes = [4, 25], strides = [1, 1]} : vector<4x32xf32> to vector<4x25xf32>
    %cst_54 = arith.constant dense<0.000000e+00> : vector<8x25xf32>
    %56 = tpu.matmul %17, %55, %cst_54 {dimension_numbers = #tpu.dot_dimension_numbers<[1], [0], [0], [1], [0, 0, 1, 1], [], []>} : vector<8x4xf32>, vector<4x25xf32>, vector<8x25xf32> -> vector<8x25xf32>
    %57 = arith.addf %54, %56 : vector<8x25xf32>
    %58 = vector.extract_strided_slice %37 {offsets = [0, 7], sizes = [4, 25], strides = [1, 1]} : vector<4x32xf32> to vector<4x25xf32>
    %cst_55 = arith.constant dense<0.000000e+00> : vector<8x25xf32>
    %59 = tpu.matmul %19, %58, %cst_55 {dimension_numbers = #tpu.dot_dimension_numbers<[1], [0], [0], [1], [0, 0, 1, 1], [], []>} : vector<8x4xf32>, vector<4x25xf32>, vector<8x25xf32> -> vector<8x25xf32>
    %60 = arith.addf %57, %59 : vector<8x25xf32>
    %61 = vector.broadcast %1 : vector<8x1xf32> to vector<8x25xf32>
    %62 = arith.addf %60, %61 : vector<8x25xf32>
    %63 = arith.mulf %62, %62 : vector<8x25xf32>
    %cst_56 = arith.constant dense<0.000000e+00> : vector<8x11xf32>
    %64 = tpu.matmul %63, %2, %cst_56 {dimension_numbers = #tpu.dot_dimension_numbers<[1], [0], [0], [1], [0, 0, 1, 1], [], []>} : vector<8x25xf32>, vector<25x11xf32>, vector<8x11xf32> -> vector<8x11xf32>
    %cst_57 = arith.constant 9.99999997E-7 : f32
    %65 = vector.broadcast %cst_57 : f32 to vector<8x11xf32>
    %66 = arith.maximumf %64, %65 : vector<8x11xf32>
    %67 = math.log %66 : vector<8x11xf32>
    %68 = vector.extract_strided_slice %67 {offsets = [0, 0], sizes = [1, 11], strides = [1, 1]} : vector<8x11xf32> to vector<1x11xf32>
    %cst_58 = arith.constant dense<0.000000e+00> : vector<1x3xf32>
    %69 = tpu.matmul %68, %21, %cst_58 {dimension_numbers = #tpu.dot_dimension_numbers<[1], [0], [0], [1], [0, 0, 1, 1], [], []>} : vector<1x11xf32>, vector<11x3xf32>, vector<1x3xf32> -> vector<1x3xf32>
    %70 = vector.extract_strided_slice %67 {offsets = [1, 0], sizes = [1, 11], strides = [1, 1]} : vector<8x11xf32> to vector<1x11xf32>
    %cst_59 = arith.constant dense<0.000000e+00> : vector<1x3xf32>
    %71 = tpu.matmul %70, %23, %cst_59 {dimension_numbers = #tpu.dot_dimension_numbers<[1], [0], [0], [1], [0, 0, 1, 1], [], []>} : vector<1x11xf32>, vector<11x3xf32>, vector<1x3xf32> -> vector<1x3xf32>
    %72 = arith.addf %69, %71 : vector<1x3xf32>
    %73 = vector.extract_strided_slice %67 {offsets = [2, 0], sizes = [1, 11], strides = [1, 1]} : vector<8x11xf32> to vector<1x11xf32>
    %cst_60 = arith.constant dense<0.000000e+00> : vector<1x3xf32>
    %74 = tpu.matmul %73, %25, %cst_60 {dimension_numbers = #tpu.dot_dimension_numbers<[1], [0], [0], [1], [0, 0, 1, 1], [], []>} : vector<1x11xf32>, vector<11x3xf32>, vector<1x3xf32> -> vector<1x3xf32>
    %75 = arith.addf %72, %74 : vector<1x3xf32>
    %76 = vector.extract_strided_slice %67 {offsets = [3, 0], sizes = [1, 11], strides = [1, 1]} : vector<8x11xf32> to vector<1x11xf32>
    %cst_61 = arith.constant dense<0.000000e+00> : vector<1x3xf32>
    %77 = tpu.matmul %76, %27, %cst_61 {dimension_numbers = #tpu.dot_dimension_numbers<[1], [0], [0], [1], [0, 0, 1, 1], [], []>} : vector<1x11xf32>, vector<11x3xf32>, vector<1x3xf32> -> vector<1x3xf32>
    %78 = arith.addf %75, %77 : vector<1x3xf32>
    %79 = vector.extract_strided_slice %67 {offsets = [4, 0], sizes = [1, 11], strides = [1, 1]} : vector<8x11xf32> to vector<1x11xf32>
    %cst_62 = arith.constant dense<0.000000e+00> : vector<1x3xf32>
    %80 = tpu.matmul %79, %29, %cst_62 {dimension_numbers = #tpu.dot_dimension_numbers<[1], [0], [0], [1], [0, 0, 1, 1], [], []>} : vector<1x11xf32>, vector<11x3xf32>, vector<1x3xf32> -> vector<1x3xf32>
    %81 = arith.addf %78, %80 : vector<1x3xf32>
    %82 = vector.extract_strided_slice %67 {offsets = [5, 0], sizes = [1, 11], strides = [1, 1]} : vector<8x11xf32> to vector<1x11xf32>
    %cst_63 = arith.constant dense<0.000000e+00> : vector<1x3xf32>
    %83 = tpu.matmul %82, %31, %cst_63 {dimension_numbers = #tpu.dot_dimension_numbers<[1], [0], [0], [1], [0, 0, 1, 1], [], []>} : vector<1x11xf32>, vector<11x3xf32>, vector<1x3xf32> -> vector<1x3xf32>
    %84 = arith.addf %81, %83 : vector<1x3xf32>
    %85 = vector.extract_strided_slice %67 {offsets = [6, 0], sizes = [1, 11], strides = [1, 1]} : vector<8x11xf32> to vector<1x11xf32>
    %cst_64 = arith.constant dense<0.000000e+00> : vector<1x3xf32>
    %86 = tpu.matmul %85, %33, %cst_64 {dimension_numbers = #tpu.dot_dimension_numbers<[1], [0], [0], [1], [0, 0, 1, 1], [], []>} : vector<1x11xf32>, vector<11x3xf32>, vector<1x3xf32> -> vector<1x3xf32>
    %87 = arith.addf %84, %86 : vector<1x3xf32>
    %88 = vector.extract_strided_slice %67 {offsets = [7, 0], sizes = [1, 11], strides = [1, 1]} : vector<8x11xf32> to vector<1x11xf32>
    %cst_65 = arith.constant dense<0.000000e+00> : vector<1x3xf32>
    %89 = tpu.matmul %88, %35, %cst_65 {dimension_numbers = #tpu.dot_dimension_numbers<[1], [0], [0], [1], [0, 0, 1, 1], [], []>} : vector<1x11xf32>, vector<11x3xf32>, vector<1x3xf32> -> vector<1x3xf32>
    %90 = arith.addf %87, %89 : vector<1x3xf32>
    %91 = arith.addf %90, %3 : vector<1x3xf32>
    %c0_66 = arith.constant 0 : index
    %c0_67 = arith.constant 0 : index
    %92 = vector.load %arg6[%c0_66, %c0_67] : memref<2x3xf32, #tpu.memory_space<vmem>>, vector<1x3xf32>
    tpu.vector_store %arg6[%c0_66, %c0_67], %91 {strides = array<i32>} : memref<2x3xf32, #tpu.memory_space<vmem>>, vector<1x3xf32>,
    %93 = vector.extract_strided_slice %0 {offsets = [1, 0, 0], sizes = [1, 4, 32], strides = [1, 1, 1]} : vector<2x4x32xf32> to vector<1x4x32xf32>
    %94 = vector.shape_cast %93 : vector<1x4x32xf32> to vector<4x32xf32>
    %95 = vector.extract_strided_slice %94 {offsets = [0, 0], sizes = [4, 25], strides = [1, 1]} : vector<4x32xf32> to vector<4x25xf32>
    %cst_68 = arith.constant dense<0.000000e+00> : vector<8x25xf32>
    %96 = tpu.matmul %5, %95, %cst_68 {dimension_numbers = #tpu.dot_dimension_numbers<[1], [0], [0], [1], [0, 0, 1, 1], [], []>} : vector<8x4xf32>, vector<4x25xf32>, vector<8x25xf32> -> vector<8x25xf32>
    %97 = vector.extract_strided_slice %94 {offsets = [0, 1], sizes = [4, 25], strides = [1, 1]} : vector<4x32xf32> to vector<4x25xf32>
    %cst_69 = arith.constant dense<0.000000e+00> : vector<8x25xf32>
    %98 = tpu.matmul %7, %97, %cst_69 {dimension_numbers = #tpu.dot_dimension_numbers<[1], [0], [0], [1], [0, 0, 1, 1], [], []>} : vector<8x4xf32>, vector<4x25xf32>, vector<8x25xf32> -> vector<8x25xf32>
    %99 = arith.addf %96, %98 : vector<8x25xf32>
    %100 = vector.extract_strided_slice %94 {offsets = [0, 2], sizes = [4, 25], strides = [1, 1]} : vector<4x32xf32> to vector<4x25xf32>
    %cst_70 = arith.constant dense<0.000000e+00> : vector<8x25xf32>
    %101 = tpu.matmul %9, %100, %cst_70 {dimension_numbers = #tpu.dot_dimension_numbers<[1], [0], [0], [1], [0, 0, 1, 1], [], []>} : vector<8x4xf32>, vector<4x25xf32>, vector<8x25xf32> -> vector<8x25xf32>
    %102 = arith.addf %99, %101 : vector<8x25xf32>
    %103 = vector.extract_strided_slice %94 {offsets = [0, 3], sizes = [4, 25], strides = [1, 1]} : vector<4x32xf32> to vector<4x25xf32>
    %cst_71 = arith.constant dense<0.000000e+00> : vector<8x25xf32>
    %104 = tpu.matmul %11, %103, %cst_71 {dimension_numbers = #tpu.dot_dimension_numbers<[1], [0], [0], [1], [0, 0, 1, 1], [], []>} : vector<8x4xf32>, vector<4x25xf32>, vector<8x25xf32> -> vector<8x25xf32>
    %105 = arith.addf %102, %104 : vector<8x25xf32>
    %106 = vector.extract_strided_slice %94 {offsets = [0, 4], sizes = [4, 25], strides = [1, 1]} : vector<4x32xf32> to vector<4x25xf32>
    %cst_72 = arith.constant dense<0.000000e+00> : vector<8x25xf32>
    %107 = tpu.matmul %13, %106, %cst_72 {dimension_numbers = #tpu.dot_dimension_numbers<[1], [0], [0], [1], [0, 0, 1, 1], [], []>} : vector<8x4xf32>, vector<4x25xf32>, vector<8x25xf32> -> vector<8x25xf32>
    %108 = arith.addf %105, %107 : vector<8x25xf32>
    %109 = vector.extract_strided_slice %94 {offsets = [0, 5], sizes = [4, 25], strides = [1, 1]} : vector<4x32xf32> to vector<4x25xf32>
    %cst_73 = arith.constant dense<0.000000e+00> : vector<8x25xf32>
    %110 = tpu.matmul %15, %109, %cst_73 {dimension_numbers = #tpu.dot_dimension_numbers<[1], [0], [0], [1], [0, 0, 1, 1], [], []>} : vector<8x4xf32>, vector<4x25xf32>, vector<8x25xf32> -> vector<8x25xf32>
    %111 = arith.addf %108, %110 : vector<8x25xf32>
    %112 = vector.extract_strided_slice %94 {offsets = [0, 6], sizes = [4, 25], strides = [1, 1]} : vector<4x32xf32> to vector<4x25xf32>
    %cst_74 = arith.constant dense<0.000000e+00> : vector<8x25xf32>
    %113 = tpu.matmul %17, %112, %cst_74 {dimension_numbers = #tpu.dot_dimension_numbers<[1], [0], [0], [1], [0, 0, 1, 1], [], []>} : vector<8x4xf32>, vector<4x25xf32>, vector<8x25xf32> -> vector<8x25xf32>
    %114 = arith.addf %111, %113 : vector<8x25xf32>
    %115 = vector.extract_strided_slice %94 {offsets = [0, 7], sizes = [4, 25], strides = [1, 1]} : vector<4x32xf32> to vector<4x25xf32>
    %cst_75 = arith.constant dense<0.000000e+00> : vector<8x25xf32>
    %116 = tpu.matmul %19, %115, %cst_75 {dimension_numbers = #tpu.dot_dimension_numbers<[1], [0], [0], [1], [0, 0, 1, 1], [], []>} : vector<8x4xf32>, vector<4x25xf32>, vector<8x25xf32> -> vector<8x25xf32>
    %117 = arith.addf %114, %116 : vector<8x25xf32>
    %118 = vector.broadcast %1 : vector<8x1xf32> to vector<8x25xf32>
    %119 = arith.addf %117, %118 : vector<8x25xf32>
    %120 = arith.mulf %119, %119 : vector<8x25xf32>
    %cst_76 = arith.constant dense<0.000000e+00> : vector<8x11xf32>
    %121 = tpu.matmul %120, %2, %cst_76 {dimension_numbers = #tpu.dot_dimension_numbers<[1], [0], [0], [1], [0, 0, 1, 1], [], []>} : vector<8x25xf32>, vector<25x11xf32>, vector<8x11xf32> -> vector<8x11xf32>
    %cst_77 = arith.constant 9.99999997E-7 : f32
    %122 = vector.broadcast %cst_77 : f32 to vector<8x11xf32>
    %123 = arith.maximumf %121, %122 : vector<8x11xf32>
    %124 = math.log %123 : vector<8x11xf32>
    %125 = vector.extract_strided_slice %124 {offsets = [0, 0], sizes = [1, 11], strides = [1, 1]} : vector<8x11xf32> to vector<1x11xf32>
    %cst_78 = arith.constant dense<0.000000e+00> : vector<1x3xf32>
    %126 = tpu.matmul %125, %21, %cst_78 {dimension_numbers = #tpu.dot_dimension_numbers<[1], [0], [0], [1], [0, 0, 1, 1], [], []>} : vector<1x11xf32>, vector<11x3xf32>, vector<1x3xf32> -> vector<1x3xf32>
    %127 = vector.extract_strided_slice %124 {offsets = [1, 0], sizes = [1, 11], strides = [1, 1]} : vector<8x11xf32> to vector<1x11xf32>
    %cst_79 = arith.constant dense<0.000000e+00> : vector<1x3xf32>
    %128 = tpu.matmul %127, %23, %cst_79 {dimension_numbers = #tpu.dot_dimension_numbers<[1], [0], [0], [1], [0, 0, 1, 1], [], []>} : vector<1x11xf32>, vector<11x3xf32>, vector<1x3xf32> -> vector<1x3xf32>
    %129 = arith.addf %126, %128 : vector<1x3xf32>
    %130 = vector.extract_strided_slice %124 {offsets = [2, 0], sizes = [1, 11], strides = [1, 1]} : vector<8x11xf32> to vector<1x11xf32>
    %cst_80 = arith.constant dense<0.000000e+00> : vector<1x3xf32>
    %131 = tpu.matmul %130, %25, %cst_80 {dimension_numbers = #tpu.dot_dimension_numbers<[1], [0], [0], [1], [0, 0, 1, 1], [], []>} : vector<1x11xf32>, vector<11x3xf32>, vector<1x3xf32> -> vector<1x3xf32>
    %132 = arith.addf %129, %131 : vector<1x3xf32>
    %133 = vector.extract_strided_slice %124 {offsets = [3, 0], sizes = [1, 11], strides = [1, 1]} : vector<8x11xf32> to vector<1x11xf32>
    %cst_81 = arith.constant dense<0.000000e+00> : vector<1x3xf32>
    %134 = tpu.matmul %133, %27, %cst_81 {dimension_numbers = #tpu.dot_dimension_numbers<[1], [0], [0], [1], [0, 0, 1, 1], [], []>} : vector<1x11xf32>, vector<11x3xf32>, vector<1x3xf32> -> vector<1x3xf32>
    %135 = arith.addf %132, %134 : vector<1x3xf32>
    %136 = vector.extract_strided_slice %124 {offsets = [4, 0], sizes = [1, 11], strides = [1, 1]} : vector<8x11xf32> to vector<1x11xf32>
    %cst_82 = arith.constant dense<0.000000e+00> : vector<1x3xf32>
    %137 = tpu.matmul %136, %29, %cst_82 {dimension_numbers = #tpu.dot_dimension_numbers<[1], [0], [0], [1], [0, 0, 1, 1], [], []>} : vector<1x11xf32>, vector<11x3xf32>, vector<1x3xf32> -> vector<1x3xf32>
    %138 = arith.addf %135, %137 : vector<1x3xf32>
    %139 = vector.extract_strided_slice %124 {offsets = [5, 0], sizes = [1, 11], strides = [1, 1]} : vector<8x11xf32> to vector<1x11xf32>
    %cst_83 = arith.constant dense<0.000000e+00> : vector<1x3xf32>
    %140 = tpu.matmul %139, %31, %cst_83 {dimension_numbers = #tpu.dot_dimension_numbers<[1], [0], [0], [1], [0, 0, 1, 1], [], []>} : vector<1x11xf32>, vector<11x3xf32>, vector<1x3xf32> -> vector<1x3xf32>
    %141 = arith.addf %138, %140 : vector<1x3xf32>
    %142 = vector.extract_strided_slice %124 {offsets = [6, 0], sizes = [1, 11], strides = [1, 1]} : vector<8x11xf32> to vector<1x11xf32>
    %cst_84 = arith.constant dense<0.000000e+00> : vector<1x3xf32>
    %143 = tpu.matmul %142, %33, %cst_84 {dimension_numbers = #tpu.dot_dimension_numbers<[1], [0], [0], [1], [0, 0, 1, 1], [], []>} : vector<1x11xf32>, vector<11x3xf32>, vector<1x3xf32> -> vector<1x3xf32>
    %144 = arith.addf %141, %143 : vector<1x3xf32>
    %145 = vector.extract_strided_slice %124 {offsets = [7, 0], sizes = [1, 11], strides = [1, 1]} : vector<8x11xf32> to vector<1x11xf32>
    %cst_85 = arith.constant dense<0.000000e+00> : vector<1x3xf32>
    %146 = tpu.matmul %145, %35, %cst_85 {dimension_numbers = #tpu.dot_dimension_numbers<[1], [0], [0], [1], [0, 0, 1, 1], [], []>} : vector<1x11xf32>, vector<11x3xf32>, vector<1x3xf32> -> vector<1x3xf32>
    %147 = arith.addf %144, %146 : vector<1x3xf32>
    %148 = arith.addf %147, %3 : vector<1x3xf32>
    %c1_86 = arith.constant 1 : index
    %c0_87 = arith.constant 0 : index
    %149 = vector.load %arg6[%c1_86, %c0_87] : memref<2x3xf32, #tpu.memory_space<vmem>>, vector<1x3xf32>
    tpu.vector_store %arg6[%c1_86, %c0_87], %148 {strides = array<i32>} : memref<2x3xf32, #tpu.memory_space<vmem>>, vector<1x3xf32>,
    return
  }
}

</mosaic_0001>

<llo_original>
// kernel: tpu_custom_call.1
$region0: #{tpu_custom_call.1}
  #allocation0 [shape = 'u32[]', space=smem, size = 0x4, offset = 0x4, fixed_abs, tag = 'smem constant byte address 0x4 - core index']
  #allocation1 [shape = 'u32[72,128]{1,0:T(1,128)}', space=vmem, size = 0x9000, scoped, tag = 'internal scratch']
  %s0 = inlined_call_operand.vmem [shape: f32[2,4,32], index: 0, kind: input, shape index: {}]
  %s1 = inlined_call_operand.vmem [shape: f32[8,8,4], index: 1, kind: input, shape index: {}]
  %s2 = inlined_call_operand.vmem [shape: f32[8,1], index: 2, kind: input, shape index: {}]
  %s3 = inlined_call_operand.vmem [shape: f32[25,11], index: 3, kind: input, shape index: {}]
  %s4 = inlined_call_operand.vmem [shape: f32[8,11,3], index: 4, kind: input, shape index: {}]
  %s5 = inlined_call_operand.vmem [shape: f32[1,3], index: 5, kind: input, shape index: {}]
  %s6 = inlined_call_operand.hbm [shape: f32[2,3], index: 6, kind: output, shape index: {}]
  %s7 = sld [smem:[#allocation0]]
  $region34: #{tpu_custom_call.1} parent=0
    _
  %s9 = ssub.s32 1, %s7
  %s10 = scalar_select 0, %s9, %s7
  $region1: #{tpu_custom_call.1} parent=0
    #allocation2 [shape = 'u8[1024]{0}', space=vmem, size = 0x400, scoped, tag = 'output window, operand 0, single buffered']
    #allocation3 [shape = 's32[1]{0}', space=sflag, size = 0x4, scoped, tag = 'scoped memory for tpu_custom_call.1']
    %11 = vsyncpa [#allocation3], 0
    // Predicated region
    $region2: #{tpu_custom_call.1} parent=1 // pred_check
      _
    $region3: #{tpu_custom_call.1} parent=1 // pred_check_branch
      %13 = sbr.rel (0) target = $region5
    $region4: #{tpu_custom_call.1} parent=1 // pred_region
      _
    $region5: #{tpu_custom_call.1} parent=1 // pred_fallthru
      _
    // Predicated region
    $region6: #{tpu_custom_call.1} parent=1 // pred_check
      _
    $region7: #{tpu_custom_call.1} parent=1 // pred_check_branch
      %15 = sbr.rel (0) target = $region9
    $region8: #{tpu_custom_call.1} parent=1 // pred_region
      _
    $region9: #{tpu_custom_call.1} parent=1 // pred_fallthru
      _
    // Predicated region
    $region10: #{tpu_custom_call.1} parent=1 // pred_check
      _
    $region11: #{tpu_custom_call.1} parent=1 // pred_check_branch
      %17 = sbr.rel (0) target = $region13
    $region12: #{tpu_custom_call.1} parent=1 // pred_region
      _
    $region13: #{tpu_custom_call.1} parent=1 // pred_fallthru
      _
    // Predicated region
    $region14: #{tpu_custom_call.1} parent=1 // pred_check
      _
    $region15: #{tpu_custom_call.1} parent=1 // pred_check_branch
      %19 = sbr.rel (0) target = $region17
    $region16: #{tpu_custom_call.1} parent=1 // pred_region
      _
    $region17: #{tpu_custom_call.1} parent=1 // pred_fallthru
      _
    // Predicated region
    $region18: #{tpu_custom_call.1} parent=1 // pred_check
      _
    $region19: #{tpu_custom_call.1} parent=1 // pred_check_branch
      %21 = sbr.rel (0) target = $region21
    $region20: #{tpu_custom_call.1} parent=1 // pred_region
      _
    $region21: #{tpu_custom_call.1} parent=1 // pred_fallthru
      _
    // Predicated region
    $region22: #{tpu_custom_call.1} parent=1 // pred_check
      _
    $region23: #{tpu_custom_call.1} parent=1 // pred_check_branch
      %23 = sbr.rel (0) target = $region25
    $region24: #{tpu_custom_call.1} parent=1 // pred_region
      _
    $region25: #{tpu_custom_call.1} parent=1 // pred_fallthru
      _
    %v24 = vld [vmem:[%s0] sm:$0xf]
    %v25 = vld [vmem:[%s0 + $0x4] sm:$0xf]
    %v26 = vld [vmem:[%s2] sm:$0xff]
    %v27 = vld [vmem:[%s3] sm:$0xff]
    %v28 = vld [vmem:[%s3 + $0x8] sm:$0xff]
    %v29 = vld [vmem:[%s3 + $0x10] sm:$0xff]
    %v30 = vld [vmem:[%s3 + $0x18] sm:$0x1]
    %v31 = vld [vmem:[%s5] sm:$0x1]
    %v32 = vld [vmem:[%s1] sm:$0xff]
    %s33 = scalar_lea.vmem %s1, 8
    %v34 = vld [vmem:[%s33] sm:$0xff]
    %s35 = scalar_lea.vmem %s1, 16
    %v36 = vld [vmem:[%s35] sm:$0xff]
    %s37 = scalar_lea.vmem %s1, 24
    %v38 = vld [vmem:[%s37] sm:$0xff]
    %s39 = scalar_lea.vmem %s1, 32
    %v40 = vld [vmem:[%s39] sm:$0xff]
    %s41 = scalar_lea.vmem %s1, 40
    %v42 = vld [vmem:[%s41] sm:$0xff]
    %s43 = scalar_lea.vmem %s1, 48
    %v44 = vld [vmem:[%s43] sm:$0xff]
    %s45 = scalar_lea.vmem %s1, 56
    %v46 = vld [vmem:[%s45] sm:$0xff]
    %v47 = vld [vmem:[%s4] sm:$0xff]
    %v48 = vld [vmem:[%s4 + $0x8] sm:$0x7]
    %s49 = scalar_lea.vmem %s4, 16
    %v50 = vld [vmem:[%s49] sm:$0xff]
    %v51 = vld [vmem:[%s49 + $0x8] sm:$0x7]
    %s52 = scalar_lea.vmem %s4, 32
    %v53 = vld [vmem:[%s52] sm:$0xff]
    %v54 = vld [vmem:[%s52 + $0x8] sm:$0x7]
    %s55 = scalar_lea.vmem %s4, 48
    %v56 = vld [vmem:[%s55] sm:$0xff]
    %v57 = vld [vmem:[%s55 + $0x8] sm:$0x7]
    %s58 = scalar_lea.vmem %s4, 64
    %v59 = vld [vmem:[%s58] sm:$0xff]
    %v60 = vld [vmem:[%s58 + $0x8] sm:$0x7]
    %s61 = scalar_lea.vmem %s4, 80
    %v62 = vld [vmem:[%s61] sm:$0xff]
    %v63 = vld [vmem:[%s61 + $0x8] sm:$0x7]
    %s64 = scalar_lea.vmem %s4, 96
    %v65 = vld [vmem:[%s64] sm:$0xff]
    %v66 = vld [vmem:[%s64 + $0x8] sm:$0x7]
    %s67 = scalar_lea.vmem %s4, 112
    %v68 = vld [vmem:[%s67] sm:$0xff]
    %v69 = vld [vmem:[%s67 + $0x8] sm:$0x7]
    %71 = vrot.lane.b32.xlu0 %v24, 127
    %v72 = vpop.permute.xlu0 %71
    %vm73 = vcmask 31744
    %v75 = vsel %vm73, %v34, 0
    %vm77 = vcmask 1043456
    %v78 = vsel %vm77, %v72, 0
    %80 = vmatpush.msra.mxu0 0.0
    %81 = vmatpush.msra.mxu0 0.0
    %82 = vmatpush.msra.mxu0 0.0
    %83 = vmatpush.msra.mxu0 0.0
    %84 = vmatpush.msra.mxu0 0.0
    %85 = vmatpush.msra.mxu0 0.0
    %86 = vmatpush.msra.mxu0 0.0
    %87 = vmatpush.msra.mxu0 0.0
    %88 = vmatpush.msra.mxu0 0.0
    %89 = vmatpush.msra.mxu0 0.0
    %90 = vmatpush.msra.mxu0 0.0
    %91 = vmatpush.msra.mxu0 0.0
    %92 = vmatpush.msra.mxu0 0.0
    %93 = vmatpush.msra.mxu0 0.0
    %94 = vmatpush.msra.mxu0 0.0
    %95 = vmatpush.msra.mxu0 %v78
    %96 = vmatmul.f32.gmra.mxu0 %v75
    %v97 = vpop.f32.mrf.mxu0
    %v98 = vadd.f32 0.0, %v97
    %99 = vdwg.mxu0
    %v101 = vsel %vm73, %v32, 0
    %v103 = vsel %vm77, %v24, 0
    %105 = vmatpush.msra.mxu0 0.0
    %106 = vmatpush.msra.mxu0 0.0
    %107 = vmatpush.msra.mxu0 0.0
    %108 = vmatpush.msra.mxu0 0.0
    %109 = vmatpush.msra.mxu0 0.0
    %110 = vmatpush.msra.mxu0 0.0
    %111 = vmatpush.msra.mxu0 0.0
    %112 = vmatpush.msra.mxu0 0.0
    %113 = vmatpush.msra.mxu0 0.0
    %114 = vmatpush.msra.mxu0 0.0
    %115 = vmatpush.msra.mxu0 0.0
    %116 = vmatpush.msra.mxu0 0.0
    %117 = vmatpush.msra.mxu0 0.0
    %118 = vmatpush.msra.mxu0 0.0
    %119 = vmatpush.msra.mxu0 0.0
    %120 = vmatpush.msra.mxu0 %v103
    %121 = vmatmul.f32.gmra.mxu0 %v101
    %v122 = vpop.f32.mrf.mxu0
    %v123 = vadd.f32 %v98, %v122
    %124 = vdwg.mxu0
    %125 = vrot.lane.b32.xlu0 %v24, 126
    %v126 = vpop.permute.xlu0 %125
    %v128 = vsel %vm73, %v36, 0
    %v130 = vsel %vm77, %v126, 0
    %132 = vmatpush.msra.mxu0 0.0
    %133 = vmatpush.msra.mxu0 0.0
    %134 = vmatpush.msra.mxu0 0.0
    %135 = vmatpush.msra.mxu0 0.0
    %136 = vmatpush.msra.mxu0 0.0
    %137 = vmatpush.msra.mxu0 0.0
    %138 = vmatpush.msra.mxu0 0.0
    %139 = vmatpush.msra.mxu0 0.0
    %140 = vmatpush.msra.mxu0 0.0
    %141 = vmatpush.msra.mxu0 0.0
    %142 = vmatpush.msra.mxu0 0.0
    %143 = vmatpush.msra.mxu0 0.0
    %144 = vmatpush.msra.mxu0 0.0
    %145 = vmatpush.msra.mxu0 0.0
    %146 = vmatpush.msra.mxu0 0.0
    %147 = vmatpush.msra.mxu0 %v130
    %148 = vmatmul.f32.gmra.mxu0 %v128
    %v149 = vpop.f32.mrf.mxu0
    %v150 = vadd.f32 0.0, %v149
    %151 = vdwg.mxu0
    %v152 = vadd.f32 %v123, %v150
    %153 = vrot.lane.b32.xlu0 %v24, 125
    %v154 = vpop.permute.xlu0 %153
    %v156 = vsel %vm73, %v38, 0
    %v158 = vsel %vm77, %v154, 0
    %160 = vmatpush.msra.mxu0 0.0
    %161 = vmatpush.msra.mxu0 0.0
    %162 = vmatpush.msra.mxu0 0.0
    %163 = vmatpush.msra.mxu0 0.0
    %164 = vmatpush.msra.mxu0 0.0
    %165 = vmatpush.msra.mxu0 0.0
    %166 = vmatpush.msra.mxu0 0.0
    %167 = vmatpush.msra.mxu0 0.0
    %168 = vmatpush.msra.mxu0 0.0
    %169 = vmatpush.msra.mxu0 0.0
    %170 = vmatpush.msra.mxu0 0.0
    %171 = vmatpush.msra.mxu0 0.0
    %172 = vmatpush.msra.mxu0 0.0
    %173 = vmatpush.msra.mxu0 0.0
    %174 = vmatpush.msra.mxu0 0.0
    %175 = vmatpush.msra.mxu0 %v158
    %176 = vmatmul.f32.gmra.mxu0 %v156
    %v177 = vpop.f32.mrf.mxu0
    %v178 = vadd.f32 0.0, %v177
    %179 = vdwg.mxu0
    %v180 = vadd.f32 %v152, %v178
    %181 = vrot.lane.b32.xlu0 %v24, 124
    %v182 = vpop.permute.xlu0 %181
    %v184 = vsel %vm73, %v40, 0
    %v186 = vsel %vm77, %v182, 0
    %188 = vmatpush.msra.mxu0 0.0
    %189 = vmatpush.msra.mxu0 0.0
    %190 = vmatpush.msra.mxu0 0.0
    %191 = vmatpush.msra.mxu0 0.0
    %192 = vmatpush.msra.mxu0 0.0
    %193 = vmatpush.msra.mxu0 0.0
    %194 = vmatpush.msra.mxu0 0.0
    %195 = vmatpush.msra.mxu0 0.0
    %196 = vmatpush.msra.mxu0 0.0
    %197 = vmatpush.msra.mxu0 0.0
    %198 = vmatpush.msra.mxu0 0.0
    %199 = vmatpush.msra.mxu0 0.0
    %200 = vmatpush.msra.mxu0 0.0
    %201 = vmatpush.msra.mxu0 0.0
    %202 = vmatpush.msra.mxu0 0.0
    %203 = vmatpush.msra.mxu0 %v186
    %204 = vmatmul.f32.gmra.mxu0 %v184
    %v205 = vpop.f32.mrf.mxu0
    %v206 = vadd.f32 0.0, %v205
    %207 = vdwg.mxu0
    %v208 = vadd.f32 %v180, %v206
    %209 = vrot.lane.b32.xlu0 %v24, 123
    %v210 = vpop.permute.xlu0 %209
    %v212 = vsel %vm73, %v42, 0
    %v214 = vsel %vm77, %v210, 0
    %216 = vmatpush.msra.mxu0 0.0
    %217 = vmatpush.msra.mxu0 0.0
    %218 = vmatpush.msra.mxu0 0.0
    %219 = vmatpush.msra.mxu0 0.0
    %220 = vmatpush.msra.mxu0 0.0
    %221 = vmatpush.msra.mxu0 0.0
    %222 = vmatpush.msra.mxu0 0.0
    %223 = vmatpush.msra.mxu0 0.0
    %224 = vmatpush.msra.mxu0 0.0
    %225 = vmatpush.msra.mxu0 0.0
    %226 = vmatpush.msra.mxu0 0.0
    %227 = vmatpush.msra.mxu0 0.0
    %228 = vmatpush.msra.mxu0 0.0
    %229 = vmatpush.msra.mxu0 0.0
    %230 = vmatpush.msra.mxu0 0.0
    %231 = vmatpush.msra.mxu0 %v214
    %232 = vmatmul.f32.gmra.mxu0 %v212
    %v233 = vpop.f32.mrf.mxu0
    %v234 = vadd.f32 0.0, %v233
    %235 = vdwg.mxu0
    %v236 = vadd.f32 %v208, %v234
    %237 = vrot.lane.b32.xlu0 %v24, 122
    %v238 = vpop.permute.xlu0 %237
    %v240 = vsel %vm73, %v44, 0
    %v242 = vsel %vm77, %v238, 0
    %244 = vmatpush.msra.mxu0 0.0
    %245 = vmatpush.msra.mxu0 0.0
    %246 = vmatpush.msra.mxu0 0.0
    %247 = vmatpush.msra.mxu0 0.0
    %248 = vmatpush.msra.mxu0 0.0
    %249 = vmatpush.msra.mxu0 0.0
    %250 = vmatpush.msra.mxu0 0.0
    %251 = vmatpush.msra.mxu0 0.0
    %252 = vmatpush.msra.mxu0 0.0
    %253 = vmatpush.msra.mxu0 0.0
    %254 = vmatpush.msra.mxu0 0.0
    %255 = vmatpush.msra.mxu0 0.0
    %256 = vmatpush.msra.mxu0 0.0
    %257 = vmatpush.msra.mxu0 0.0
    %258 = vmatpush.msra.mxu0 0.0
    %259 = vmatpush.msra.mxu0 %v242
    %260 = vmatmul.f32.gmra.mxu0 %v240
    %v261 = vpop.f32.mrf.mxu0
    %v262 = vadd.f32 0.0, %v261
    %263 = vdwg.mxu0
    %v264 = vadd.f32 %v236, %v262
    %265 = vrot.lane.b32.xlu0 %v24, 121
    %v266 = vpop.permute.xlu0 %265
    %v268 = vsel %vm73, %v46, 0
    %v270 = vsel %vm77, %v266, 0
    %272 = vmatpush.msra.mxu0 0.0
    %273 = vmatpush.msra.mxu0 0.0
    %274 = vmatpush.msra.mxu0 0.0
    %275 = vmatpush.msra.mxu0 0.0
    %276 = vmatpush.msra.mxu0 0.0
    %277 = vmatpush.msra.mxu0 0.0
    %278 = vmatpush.msra.mxu0 0.0
    %279 = vmatpush.msra.mxu0 0.0
    %280 = vmatpush.msra.mxu0 0.0
    %281 = vmatpush.msra.mxu0 0.0
    %282 = vmatpush.msra.mxu0 0.0
    %283 = vmatpush.msra.mxu0 0.0
    %284 = vmatpush.msra.mxu0 0.0
    %285 = vmatpush.msra.mxu0 0.0
    %286 = vmatpush.msra.mxu0 0.0
    %287 = vmatpush.msra.mxu0 %v270
    %288 = vmatmul.f32.gmra.mxu0 %v268
    %v289 = vpop.f32.mrf.mxu0
    %v290 = vadd.f32 0.0, %v289
    %291 = vdwg.mxu0
    %v292 = vadd.f32 %v264, %v290
    %294 = vset.pattern.permute.xlu0 0
    %295 = vperm.xlu0 %294, %v26
    %v296 = vpop.permute.xlu0 %295
    %v298 = vadd.f32 %v292, %v296
    %v299 = vmul.f32 %v298, %v298
    %vm300 = vcmask 203776
    %v302 = vsel %vm300, %v299, 0
    %vm304 = vcmask 1040384
    %v306 = vsel %vm304, %v30, 0
    %308 = vmatpush.msra.mxu0 0.0
    %309 = vmatpush.msra.mxu0 0.0
    %310 = vmatpush.msra.mxu0 0.0
    %311 = vmatpush.msra.mxu0 0.0
    %312 = vmatpush.msra.mxu0 0.0
    %313 = vmatpush.msra.mxu0 0.0
    %314 = vmatpush.msra.mxu0 0.0
    %315 = vmatpush.msra.mxu0 0.0
    %316 = vmatpush.msra.mxu0 0.0
    %317 = vmatpush.msra.mxu0 0.0
    %318 = vmatpush.msra.mxu0 0.0
    %319 = vmatpush.msra.mxu0 0.0
    %320 = vmatpush.msra.mxu0 %v306
    %321 = vmatpush.msra.mxu0 %v29
    %322 = vmatpush.msra.mxu0 %v28
    %323 = vmatpush.msra.mxu0 %v27
    %324 = vmatmul.f32.gmra.mxu0 %v302
    %v325 = vpop.f32.mrf.mxu0
    %v326 = vadd.f32 0.0, %v325
    %327 = vdwg.mxu0
    %v328 = vmax.f32 %v326, 1e-06
    %v329 = vlog2.pop %v328
    %v330 = vmul.f32 %v329, 0.6931472
    %v332 = vrot.slane %v330, 1
    %vm333 = vcmask 89088
    %v334 = vsel %vm333, %v332, 0
    %vm336 = vcmask 1042432
    %v338 = vsel %vm336, %v51, 0
    %340 = vmatpush.msra.mxu0 0.0
    %341 = vmatpush.msra.mxu0 0.0
    %342 = vmatpush.msra.mxu0 0.0
    %343 = vmatpush.msra.mxu0 0.0
    %344 = vmatpush.msra.mxu0 0.0
    %345 = vmatpush.msra.mxu0 0.0
    %346 = vmatpush.msra.mxu0 0.0
    %347 = vmatpush.msra.mxu0 0.0
    %348 = vmatpush.msra.mxu0 0.0
    %349 = vmatpush.msra.mxu0 0.0
    %350 = vmatpush.msra.mxu0 0.0
    %351 = vmatpush.msra.mxu0 0.0
    %352 = vmatpush.msra.mxu0 0.0
    %353 = vmatpush.msra.mxu0 0.0
    %354 = vmatpush.msra.mxu0 %v338
    %355 = vmatpush.msra.mxu0 %v50
    %356 = vmatmul.f32.gmra.mxu0 %v334
    %v357 = vpop.f32.mrf.mxu0
    %v358 = vadd.f32 0.0, %v357
    %359 = vdwg.mxu0
    %v360 = vsel %vm333, %v330, 0
    %v363 = vsel %vm336, %v48, 0
    %365 = vmatpush.msra.mxu0 0.0
    %366 = vmatpush.msra.mxu0 0.0
    %367 = vmatpush.msra.mxu0 0.0
    %368 = vmatpush.msra.mxu0 0.0
    %369 = vmatpush.msra.mxu0 0.0
    %370 = vmatpush.msra.mxu0 0.0
    %371 = vmatpush.msra.mxu0 0.0
    %372 = vmatpush.msra.mxu0 0.0
    %373 = vmatpush.msra.mxu0 0.0
    %374 = vmatpush.msra.mxu0 0.0
    %375 = vmatpush.msra.mxu0 0.0
    %376 = vmatpush.msra.mxu0 0.0
    %377 = vmatpush.msra.mxu0 0.0
    %378 = vmatpush.msra.mxu0 0.0
    %379 = vmatpush.msra.mxu0 %v363
    %380 = vmatpush.msra.mxu0 %v47
    %381 = vmatmul.f32.gmra.mxu0 %v360
    %v382 = vpop.f32.mrf.mxu0
    %v383 = vadd.f32 %v358, %v382
    %384 = vdwg.mxu0
    %v385 = vrot.slane %v330, 2
    %v386 = vsel %vm333, %v385, 0
    %v389 = vsel %vm336, %v54, 0
    %391 = vmatpush.msra.mxu0 0.0
    %392 = vmatpush.msra.mxu0 0.0
    %393 = vmatpush.msra.mxu0 0.0
    %394 = vmatpush.msra.mxu0 0.0
    %395 = vmatpush.msra.mxu0 0.0
    %396 = vmatpush.msra.mxu0 0.0
    %397 = vmatpush.msra.mxu0 0.0
    %398 = vmatpush.msra.mxu0 0.0
    %399 = vmatpush.msra.mxu0 0.0
    %400 = vmatpush.msra.mxu0 0.0
    %401 = vmatpush.msra.mxu0 0.0
    %402 = vmatpush.msra.mxu0 0.0
    %403 = vmatpush.msra.mxu0 0.0
    %404 = vmatpush.msra.mxu0 0.0
    %405 = vmatpush.msra.mxu0 %v389
    %406 = vmatpush.msra.mxu0 %v53
    %407 = vmatmul.f32.gmra.mxu0 %v386
    %v408 = vpop.f32.mrf.mxu0
    %v409 = vadd.f32 0.0, %v408
    %410 = vdwg.mxu0
    %v411 = vadd.f32 %v383, %v409
    %v412 = vrot.slane %v330, 3
    %v413 = vsel %vm333, %v412, 0
    %v416 = vsel %vm336, %v57, 0
    %418 = vmatpush.msra.mxu0 0.0
    %419 = vmatpush.msra.mxu0 0.0
    %420 = vmatpush.msra.mxu0 0.0
    %421 = vmatpush.msra.mxu0 0.0
    %422 = vmatpush.msra.mxu0 0.0
    %423 = vmatpush.msra.mxu0 0.0
    %424 = vmatpush.msra.mxu0 0.0
    %425 = vmatpush.msra.mxu0 0.0
    %426 = vmatpush.msra.mxu0 0.0
    %427 = vmatpush.msra.mxu0 0.0
    %428 = vmatpush.msra.mxu0 0.0
    %429 = vmatpush.msra.mxu0 0.0
    %430 = vmatpush.msra.mxu0 0.0
    %431 = vmatpush.msra.mxu0 0.0
    %432 = vmatpush.msra.mxu0 %v416
    %433 = vmatpush.msra.mxu0 %v56
    %434 = vmatmul.f32.gmra.mxu0 %v413
    %v435 = vpop.f32.mrf.mxu0
    %v436 = vadd.f32 0.0, %v435
    %437 = vdwg.mxu0
    %v438 = vadd.f32 %v411, %v436
    %v439 = vrot.slane %v330, 4
    %v440 = vsel %vm333, %v439, 0
    %v443 = vsel %vm336, %v60, 0
    %445 = vmatpush.msra.mxu0 0.0
    %446 = vmatpush.msra.mxu0 0.0
    %447 = vmatpush.msra.mxu0 0.0
    %448 = vmatpush.msra.mxu0 0.0
    %449 = vmatpush.msra.mxu0 0.0
    %450 = vmatpush.msra.mxu0 0.0
    %451 = vmatpush.msra.mxu0 0.0
    %452 = vmatpush.msra.mxu0 0.0
    %453 = vmatpush.msra.mxu0 0.0
    %454 = vmatpush.msra.mxu0 0.0
    %455 = vmatpush.msra.mxu0 0.0
    %456 = vmatpush.msra.mxu0 0.0
    %457 = vmatpush.msra.mxu0 0.0
    %458 = vmatpush.msra.mxu0 0.0
    %459 = vmatpush.msra.mxu0 %v443
    %460 = vmatpush.msra.mxu0 %v59
    %461 = vmatmul.f32.gmra.mxu0 %v440
    %v462 = vpop.f32.mrf.mxu0
    %v463 = vadd.f32 0.0, %v462
    %464 = vdwg.mxu0
    %v465 = vadd.f32 %v438, %v463
    %v466 = vrot.slane %v330, 5
    %v467 = vsel %vm333, %v466, 0
    %v470 = vsel %vm336, %v63, 0
    %472 = vmatpush.msra.mxu0 0.0
    %473 = vmatpush.msra.mxu0 0.0
    %474 = vmatpush.msra.mxu0 0.0
    %475 = vmatpush.msra.mxu0 0.0
    %476 = vmatpush.msra.mxu0 0.0
    %477 = vmatpush.msra.mxu0 0.0
    %478 = vmatpush.msra.mxu0 0.0
    %479 = vmatpush.msra.mxu0 0.0
    %480 = vmatpush.msra.mxu0 0.0
    %481 = vmatpush.msra.mxu0 0.0
    %482 = vmatpush.msra.mxu0 0.0
    %483 = vmatpush.msra.mxu0 0.0
    %484 = vmatpush.msra.mxu0 0.0
    %485 = vmatpush.msra.mxu0 0.0
    %486 = vmatpush.msra.mxu0 %v470
    %487 = vmatpush.msra.mxu0 %v62
    %488 = vmatmul.f32.gmra.mxu0 %v467
    %v489 = vpop.f32.mrf.mxu0
    %v490 = vadd.f32 0.0, %v489
    %491 = vdwg.mxu0
    %v492 = vadd.f32 %v465, %v490
    %v493 = vrot.slane %v330, 6
    %v494 = vsel %vm333, %v493, 0
    %v497 = vsel %vm336, %v66, 0
    %499 = vmatpush.msra.mxu0 0.0
    %500 = vmatpush.msra.mxu0 0.0
    %501 = vmatpush.msra.mxu0 0.0
    %502 = vmatpush.msra.mxu0 0.0
    %503 = vmatpush.msra.mxu0 0.0
    %504 = vmatpush.msra.mxu0 0.0
    %505 = vmatpush.msra.mxu0 0.0
    %506 = vmatpush.msra.mxu0 0.0
    %507 = vmatpush.msra.mxu0 0.0
    %508 = vmatpush.msra.mxu0 0.0
    %509 = vmatpush.msra.mxu0 0.0
    %510 = vmatpush.msra.mxu0 0.0
    %511 = vmatpush.msra.mxu0 0.0
    %512 = vmatpush.msra.mxu0 0.0
    %513 = vmatpush.msra.mxu0 %v497
    %514 = vmatpush.msra.mxu0 %v65
    %515 = vmatmul.f32.gmra.mxu0 %v494
    %v516 = vpop.f32.mrf.mxu0
    %v517 = vadd.f32 0.0, %v516
    %518 = vdwg.mxu0
    %v519 = vadd.f32 %v492, %v517
    %v520 = vrot.slane %v330, 7
    %v521 = vsel %vm333, %v520, 0
    %v524 = vsel %vm336, %v69, 0
    %526 = vmatpush.msra.mxu0 0.0
    %527 = vmatpush.msra.mxu0 0.0
    %528 = vmatpush.msra.mxu0 0.0
    %529 = vmatpush.msra.mxu0 0.0
    %530 = vmatpush.msra.mxu0 0.0
    %531 = vmatpush.msra.mxu0 0.0
    %532 = vmatpush.msra.mxu0 0.0
    %533 = vmatpush.msra.mxu0 0.0
    %534 = vmatpush.msra.mxu0 0.0
    %535 = vmatpush.msra.mxu0 0.0
    %536 = vmatpush.msra.mxu0 0.0
    %537 = vmatpush.msra.mxu0 0.0
    %538 = vmatpush.msra.mxu0 0.0
    %539 = vmatpush.msra.mxu0 0.0
    %540 = vmatpush.msra.mxu0 %v524
    %541 = vmatpush.msra.mxu0 %v68
    %542 = vmatmul.f32.gmra.mxu0 %v521
    %v543 = vpop.f32.mrf.mxu0
    %v544 = vadd.f32 0.0, %v543
    %545 = vdwg.mxu0
    %v546 = vadd.f32 %v519, %v544
    %v547 = vadd.f32 %v546, %v31
    %vm548 = vcmask 16384
    %549 = vst.msk [vmem:[#allocation2] sm:$0x1] %vm548, %v547
    %551 = vrot.lane.b32.xlu0 %v25, 127
    %v552 = vpop.permute.xlu0 %551
    %v553 = vsel %vm77, %v552, 0
    %555 = vmatpush.msra.mxu0 0.0
    %556 = vmatpush.msra.mxu0 0.0
    %557 = vmatpush.msra.mxu0 0.0
    %558 = vmatpush.msra.mxu0 0.0
    %559 = vmatpush.msra.mxu0 0.0
    %560 = vmatpush.msra.mxu0 0.0
    %561 = vmatpush.msra.mxu0 0.0
    %562 = vmatpush.msra.mxu0 0.0
    %563 = vmatpush.msra.mxu0 0.0
    %564 = vmatpush.msra.mxu0 0.0
    %565 = vmatpush.msra.mxu0 0.0
    %566 = vmatpush.msra.mxu0 0.0
    %567 = vmatpush.msra.mxu0 0.0
    %568 = vmatpush.msra.mxu0 0.0
    %569 = vmatpush.msra.mxu0 0.0
    %570 = vmatpush.msra.mxu0 %v553
    %571 = vmatmul.f32.gmra.mxu0 %v75
    %v572 = vpop.f32.mrf.mxu0
    %v573 = vadd.f32 0.0, %v572
    %574 = vdwg.mxu0
    %v575 = vsel %vm77, %v25, 0
    %577 = vmatpush.msra.mxu0 0.0
    %578 = vmatpush.msra.mxu0 0.0
    %579 = vmatpush.msra.mxu0 0.0
    %580 = vmatpush.msra.mxu0 0.0
    %581 = vmatpush.msra.mxu0 0.0
    %582 = vmatpush.msra.mxu0 0.0
    %583 = vmatpush.msra.mxu0 0.0
    %584 = vmatpush.msra.mxu0 0.0
    %585 = vmatpush.msra.mxu0 0.0
    %586 = vmatpush.msra.mxu0 0.0
    %587 = vmatpush.msra.mxu0 0.0
    %588 = vmatpush.msra.mxu0 0.0
    %589 = vmatpush.msra.mxu0 0.0
    %590 = vmatpush.msra.mxu0 0.0
    %591 = vmatpush.msra.mxu0 0.0
    %592 = vmatpush.msra.mxu0 %v575
    %593 = vmatmul.f32.gmra.mxu0 %v101
    %v594 = vpop.f32.mrf.mxu0
    %v595 = vadd.f32 %v573, %v594
    %596 = vdwg.mxu0
    %597 = vrot.lane.b32.xlu0 %v25, 126
    %v598 = vpop.permute.xlu0 %597
    %v599 = vsel %vm77, %v598, 0
    %601 = vmatpush.msra.mxu0 0.0
    %602 = vmatpush.msra.mxu0 0.0
    %603 = vmatpush.msra.mxu0 0.0
    %604 = vmatpush.msra.mxu0 0.0
    %605 = vmatpush.msra.mxu0 0.0
    %606 = vmatpush.msra.mxu0 0.0
    %607 = vmatpush.msra.mxu0 0.0
    %608 = vmatpush.msra.mxu0 0.0
    %609 = vmatpush.msra.mxu0 0.0
    %610 = vmatpush.msra.mxu0 0.0
    %611 = vmatpush.msra.mxu0 0.0
    %612 = vmatpush.msra.mxu0 0.0
    %613 = vmatpush.msra.mxu0 0.0
    %614 = vmatpush.msra.mxu0 0.0
    %615 = vmatpush.msra.mxu0 0.0
    %616 = vmatpush.msra.mxu0 %v599
    %617 = vmatmul.f32.gmra.mxu0 %v128
    %v618 = vpop.f32.mrf.mxu0
    %v619 = vadd.f32 0.0, %v618
    %620 = vdwg.mxu0
    %v621 = vadd.f32 %v595, %v619
    %622 = vrot.lane.b32.xlu0 %v25, 125
    %v623 = vpop.permute.xlu0 %622
    %v624 = vsel %vm77, %v623, 0
    %626 = vmatpush.msra.mxu0 0.0
    %627 = vmatpush.msra.mxu0 0.0
    %628 = vmatpush.msra.mxu0 0.0
    %629 = vmatpush.msra.mxu0 0.0
    %630 = vmatpush.msra.mxu0 0.0
    %631 = vmatpush.msra.mxu0 0.0
    %632 = vmatpush.msra.mxu0 0.0
    %633 = vmatpush.msra.mxu0 0.0
    %634 = vmatpush.msra.mxu0 0.0
    %635 = vmatpush.msra.mxu0 0.0
    %636 = vmatpush.msra.mxu0 0.0
    %637 = vmatpush.msra.mxu0 0.0
    %638 = vmatpush.msra.mxu0 0.0
    %639 = vmatpush.msra.mxu0 0.0
    %640 = vmatpush.msra.mxu0 0.0
    %641 = vmatpush.msra.mxu0 %v624
    %642 = vmatmul.f32.gmra.mxu0 %v156
    %v643 = vpop.f32.mrf.mxu0
    %v644 = vadd.f32 0.0, %v643
    %645 = vdwg.mxu0
    %v646 = vadd.f32 %v621, %v644
    %647 = vrot.lane.b32.xlu0 %v25, 124
    %v648 = vpop.permute.xlu0 %647
    %v649 = vsel %vm77, %v648, 0
    %651 = vmatpush.msra.mxu0 0.0
    %652 = vmatpush.msra.mxu0 0.0
    %653 = vmatpush.msra.mxu0 0.0
    %654 = vmatpush.msra.mxu0 0.0
    %655 = vmatpush.msra.mxu0 0.0
    %656 = vmatpush.msra.mxu0 0.0
    %657 = vmatpush.msra.mxu0 0.0
    %658 = vmatpush.msra.mxu0 0.0
    %659 = vmatpush.msra.mxu0 0.0
    %660 = vmatpush.msra.mxu0 0.0
    %661 = vmatpush.msra.mxu0 0.0
    %662 = vmatpush.msra.mxu0 0.0
    %663 = vmatpush.msra.mxu0 0.0
    %664 = vmatpush.msra.mxu0 0.0
    %665 = vmatpush.msra.mxu0 0.0
    %666 = vmatpush.msra.mxu0 %v649
    %667 = vmatmul.f32.gmra.mxu0 %v184
    %v668 = vpop.f32.mrf.mxu0
    %v669 = vadd.f32 0.0, %v668
    %670 = vdwg.mxu0
    %v671 = vadd.f32 %v646, %v669
    %672 = vrot.lane.b32.xlu0 %v25, 123
    %v673 = vpop.permute.xlu0 %672
    %v674 = vsel %vm77, %v673, 0
    %676 = vmatpush.msra.mxu0 0.0
    %677 = vmatpush.msra.mxu0 0.0
    %678 = vmatpush.msra.mxu0 0.0
    %679 = vmatpush.msra.mxu0 0.0
    %680 = vmatpush.msra.mxu0 0.0
    %681 = vmatpush.msra.mxu0 0.0
    %682 = vmatpush.msra.mxu0 0.0
    %683 = vmatpush.msra.mxu0 0.0
    %684 = vmatpush.msra.mxu0 0.0
    %685 = vmatpush.msra.mxu0 0.0
    %686 = vmatpush.msra.mxu0 0.0
    %687 = vmatpush.msra.mxu0 0.0
    %688 = vmatpush.msra.mxu0 0.0
    %689 = vmatpush.msra.mxu0 0.0
    %690 = vmatpush.msra.mxu0 0.0
    %691 = vmatpush.msra.mxu0 %v674
    %692 = vmatmul.f32.gmra.mxu0 %v212
    %v693 = vpop.f32.mrf.mxu0
    %v694 = vadd.f32 0.0, %v693
    %695 = vdwg.mxu0
    %v696 = vadd.f32 %v671, %v694
    %697 = vrot.lane.b32.xlu0 %v25, 122
    %v698 = vpop.permute.xlu0 %697
    %v699 = vsel %vm77, %v698, 0
    %701 = vmatpush.msra.mxu0 0.0
    %702 = vmatpush.msra.mxu0 0.0
    %703 = vmatpush.msra.mxu0 0.0
    %704 = vmatpush.msra.mxu0 0.0
    %705 = vmatpush.msra.mxu0 0.0
    %706 = vmatpush.msra.mxu0 0.0
    %707 = vmatpush.msra.mxu0 0.0
    %708 = vmatpush.msra.mxu0 0.0
    %709 = vmatpush.msra.mxu0 0.0
    %710 = vmatpush.msra.mxu0 0.0
    %711 = vmatpush.msra.mxu0 0.0
    %712 = vmatpush.msra.mxu0 0.0
    %713 = vmatpush.msra.mxu0 0.0
    %714 = vmatpush.msra.mxu0 0.0
    %715 = vmatpush.msra.mxu0 0.0
    %716 = vmatpush.msra.mxu0 %v699
    %717 = vmatmul.f32.gmra.mxu0 %v240
    %v718 = vpop.f32.mrf.mxu0
    %v719 = vadd.f32 0.0, %v718
    %720 = vdwg.mxu0
    %v721 = vadd.f32 %v696, %v719
    %722 = vrot.lane.b32.xlu0 %v25, 121
    %v723 = vpop.permute.xlu0 %722
    %v724 = vsel %vm77, %v723, 0
    %726 = vmatpush.msra.mxu0 0.0
    %727 = vmatpush.msra.mxu0 0.0
    %728 = vmatpush.msra.mxu0 0.0
    %729 = vmatpush.msra.mxu0 0.0
    %730 = vmatpush.msra.mxu0 0.0
    %731 = vmatpush.msra.mxu0 0.0
    %732 = vmatpush.msra.mxu0 0.0
    %733 = vmatpush.msra.mxu0 0.0
    %734 = vmatpush.msra.mxu0 0.0
    %735 = vmatpush.msra.mxu0 0.0
    %736 = vmatpush.msra.mxu0 0.0
    %737 = vmatpush.msra.mxu0 0.0
    %738 = vmatpush.msra.mxu0 0.0
    %739 = vmatpush.msra.mxu0 0.0
    %740 = vmatpush.msra.mxu0 0.0
    %741 = vmatpush.msra.mxu0 %v724
    %742 = vmatmul.f32.gmra.mxu0 %v268
    %v743 = vpop.f32.mrf.mxu0
    %v744 = vadd.f32 0.0, %v743
    %745 = vdwg.mxu0
    %v746 = vadd.f32 %v721, %v744
    %v747 = vadd.f32 %v746, %v296
    %v748 = vmul.f32 %v747, %v747
    %v750 = vsel %vm300, %v748, 0
    %752 = vmatpush.msra.mxu0 0.0
    %753 = vmatpush.msra.mxu0 0.0
    %754 = vmatpush.msra.mxu0 0.0
    %755 = vmatpush.msra.mxu0 0.0
    %756 = vmatpush.msra.mxu0 0.0
    %757 = vmatpush.msra.mxu0 0.0
    %758 = vmatpush.msra.mxu0 0.0
    %759 = vmatpush.msra.mxu0 0.0
    %760 = vmatpush.msra.mxu0 0.0
    %761 = vmatpush.msra.mxu0 0.0
    %762 = vmatpush.msra.mxu0 0.0
    %763 = vmatpush.msra.mxu0 0.0
    %764 = vmatpush.msra.mxu0 %v306
    %765 = vmatpush.msra.mxu0 %v29
    %766 = vmatpush.msra.mxu0 %v28
    %767 = vmatpush.msra.mxu0 %v27
    %768 = vmatmul.f32.gmra.mxu0 %v750
    %v769 = vpop.f32.mrf.mxu0
    %v770 = vadd.f32 0.0, %v769
    %771 = vdwg.mxu0
    %v772 = vmax.f32 %v770, 1e-06
    %v773 = vlog2.pop %v772
    %v774 = vmul.f32 %v773, 0.6931472
    %v776 = vrot.slane %v774, 1
    %v777 = vsel %vm333, %v776, 0
    %779 = vmatpush.msra.mxu0 0.0
    %780 = vmatpush.msra.mxu0 0.0
    %781 = vmatpush.msra.mxu0 0.0
    %782 = vmatpush.msra.mxu0 0.0
    %783 = vmatpush.msra.mxu0 0.0
    %784 = vmatpush.msra.mxu0 0.0
    %785 = vmatpush.msra.mxu0 0.0
    %786 = vmatpush.msra.mxu0 0.0
    %787 = vmatpush.msra.mxu0 0.0
    %788 = vmatpush.msra.mxu0 0.0
    %789 = vmatpush.msra.mxu0 0.0
    %790 = vmatpush.msra.mxu0 0.0
    %791 = vmatpush.msra.mxu0 0.0
    %792 = vmatpush.msra.mxu0 0.0
    %793 = vmatpush.msra.mxu0 %v338
    %794 = vmatpush.msra.mxu0 %v50
    %795 = vmatmul.f32.gmra.mxu0 %v777
    %v796 = vpop.f32.mrf.mxu0
    %v797 = vadd.f32 0.0, %v796
    %798 = vdwg.mxu0
    %v799 = vsel %vm333, %v774, 0
    %801 = vmatpush.msra.mxu0 0.0
    %802 = vmatpush.msra.mxu0 0.0
    %803 = vmatpush.msra.mxu0 0.0
    %804 = vmatpush.msra.mxu0 0.0
    %805 = vmatpush.msra.mxu0 0.0
    %806 = vmatpush.msra.mxu0 0.0
    %807 = vmatpush.msra.mxu0 0.0
    %808 = vmatpush.msra.mxu0 0.0
    %809 = vmatpush.msra.mxu0 0.0
    %810 = vmatpush.msra.mxu0 0.0
    %811 = vmatpush.msra.mxu0 0.0
    %812 = vmatpush.msra.mxu0 0.0
    %813 = vmatpush.msra.mxu0 0.0
    %814 = vmatpush.msra.mxu0 0.0
    %815 = vmatpush.msra.mxu0 %v363
    %816 = vmatpush.msra.mxu0 %v47
    %817 = vmatmul.f32.gmra.mxu0 %v799
    %v818 = vpop.f32.mrf.mxu0
    %v819 = vadd.f32 %v797, %v818
    %820 = vdwg.mxu0
    %v821 = vrot.slane %v774, 2
    %v822 = vsel %vm333, %v821, 0
    %824 = vmatpush.msra.mxu0 0.0
    %825 = vmatpush.msra.mxu0 0.0
    %826 = vmatpush.msra.mxu0 0.0
    %827 = vmatpush.msra.mxu0 0.0
    %828 = vmatpush.msra.mxu0 0.0
    %829 = vmatpush.msra.mxu0 0.0
    %830 = vmatpush.msra.mxu0 0.0
    %831 = vmatpush.msra.mxu0 0.0
    %832 = vmatpush.msra.mxu0 0.0
    %833 = vmatpush.msra.mxu0 0.0
    %834 = vmatpush.msra.mxu0 0.0
    %835 = vmatpush.msra.mxu0 0.0
    %836 = vmatpush.msra.mxu0 0.0
    %837 = vmatpush.msra.mxu0 0.0
    %838 = vmatpush.msra.mxu0 %v389
    %839 = vmatpush.msra.mxu0 %v53
    %840 = vmatmul.f32.gmra.mxu0 %v822
    %v841 = vpop.f32.mrf.mxu0
    %v842 = vadd.f32 0.0, %v841
    %843 = vdwg.mxu0
    %v844 = vadd.f32 %v819, %v842
    %v845 = vrot.slane %v774, 3
    %v846 = vsel %vm333, %v845, 0
    %848 = vmatpush.msra.mxu0 0.0
    %849 = vmatpush.msra.mxu0 0.0
    %850 = vmatpush.msra.mxu0 0.0
    %851 = vmatpush.msra.mxu0 0.0
    %852 = vmatpush.msra.mxu0 0.0
    %853 = vmatpush.msra.mxu0 0.0
    %854 = vmatpush.msra.mxu0 0.0
    %855 = vmatpush.msra.mxu0 0.0
    %856 = vmatpush.msra.mxu0 0.0
    %857 = vmatpush.msra.mxu0 0.0
    %858 = vmatpush.msra.mxu0 0.0
    %859 = vmatpush.msra.mxu0 0.0
    %860 = vmatpush.msra.mxu0 0.0
    %861 = vmatpush.msra.mxu0 0.0
    %862 = vmatpush.msra.mxu0 %v416
    %863 = vmatpush.msra.mxu0 %v56
    %864 = vmatmul.f32.gmra.mxu0 %v846
    %v865 = vpop.f32.mrf.mxu0
    %v866 = vadd.f32 0.0, %v865
    %867 = vdwg.mxu0
    %v868 = vadd.f32 %v844, %v866
    %v869 = vrot.slane %v774, 4
    %v870 = vsel %vm333, %v869, 0
    %872 = vmatpush.msra.mxu0 0.0
    %873 = vmatpush.msra.mxu0 0.0
    %874 = vmatpush.msra.mxu0 0.0
    %875 = vmatpush.msra.mxu0 0.0
    %876 = vmatpush.msra.mxu0 0.0
    %877 = vmatpush.msra.mxu0 0.0
    %878 = vmatpush.msra.mxu0 0.0
    %879 = vmatpush.msra.mxu0 0.0
    %880 = vmatpush.msra.mxu0 0.0
    %881 = vmatpush.msra.mxu0 0.0
    %882 = vmatpush.msra.mxu0 0.0
    %883 = vmatpush.msra.mxu0 0.0
    %884 = vmatpush.msra.mxu0 0.0
    %885 = vmatpush.msra.mxu0 0.0
    %886 = vmatpush.msra.mxu0 %v443
    %887 = vmatpush.msra.mxu0 %v59
    %888 = vmatmul.f32.gmra.mxu0 %v870
    %v889 = vpop.f32.mrf.mxu0
    %v890 = vadd.f32 0.0, %v889
    %891 = vdwg.mxu0
    %v892 = vadd.f32 %v868, %v890
    %v893 = vrot.slane %v774, 5
    %v894 = vsel %vm333, %v893, 0
    %896 = vmatpush.msra.mxu0 0.0
    %897 = vmatpush.msra.mxu0 0.0
    %898 = vmatpush.msra.mxu0 0.0
    %899 = vmatpush.msra.mxu0 0.0
    %900 = vmatpush.msra.mxu0 0.0
    %901 = vmatpush.msra.mxu0 0.0
    %902 = vmatpush.msra.mxu0 0.0
    %903 = vmatpush.msra.mxu0 0.0
    %904 = vmatpush.msra.mxu0 0.0
    %905 = vmatpush.msra.mxu0 0.0
    %906 = vmatpush.msra.mxu0 0.0
    %907 = vmatpush.msra.mxu0 0.0
    %908 = vmatpush.msra.mxu0 0.0
    %909 = vmatpush.msra.mxu0 0.0
    %910 = vmatpush.msra.mxu0 %v470
    %911 = vmatpush.msra.mxu0 %v62
    %912 = vmatmul.f32.gmra.mxu0 %v894
    %v913 = vpop.f32.mrf.mxu0
    %v914 = vadd.f32 0.0, %v913
    %915 = vdwg.mxu0
    %v916 = vadd.f32 %v892, %v914
    %v917 = vrot.slane %v774, 6
    %v918 = vsel %vm333, %v917, 0
    %920 = vmatpush.msra.mxu0 0.0
    %921 = vmatpush.msra.mxu0 0.0
    %922 = vmatpush.msra.mxu0 0.0
    %923 = vmatpush.msra.mxu0 0.0
    %924 = vmatpush.msra.mxu0 0.0
    %925 = vmatpush.msra.mxu0 0.0
    %926 = vmatpush.msra.mxu0 0.0
    %927 = vmatpush.msra.mxu0 0.0
    %928 = vmatpush.msra.mxu0 0.0
    %929 = vmatpush.msra.mxu0 0.0
    %930 = vmatpush.msra.mxu0 0.0
    %931 = vmatpush.msra.mxu0 0.0
    %932 = vmatpush.msra.mxu0 0.0
    %933 = vmatpush.msra.mxu0 0.0
    %934 = vmatpush.msra.mxu0 %v497
    %935 = vmatpush.msra.mxu0 %v65
    %936 = vmatmul.f32.gmra.mxu0 %v918
    %v937 = vpop.f32.mrf.mxu0
    %v938 = vadd.f32 0.0, %v937
    %939 = vdwg.mxu0
    %v940 = vadd.f32 %v916, %v938
    %v941 = vrot.slane %v774, 7
    %v942 = vsel %vm333, %v941, 0
    %944 = vmatpush.msra.mxu0 0.0
    %945 = vmatpush.msra.mxu0 0.0
    %946 = vmatpush.msra.mxu0 0.0
    %947 = vmatpush.msra.mxu0 0.0
    %948 = vmatpush.msra.mxu0 0.0
    %949 = vmatpush.msra.mxu0 0.0
    %950 = vmatpush.msra.mxu0 0.0
    %951 = vmatpush.msra.mxu0 0.0
    %952 = vmatpush.msra.mxu0 0.0
    %953 = vmatpush.msra.mxu0 0.0
    %954 = vmatpush.msra.mxu0 0.0
    %955 = vmatpush.msra.mxu0 0.0
    %956 = vmatpush.msra.mxu0 0.0
    %957 = vmatpush.msra.mxu0 0.0
    %958 = vmatpush.msra.mxu0 %v524
    %959 = vmatpush.msra.mxu0 %v68
    %960 = vmatmul.f32.gmra.mxu0 %v942
    %v961 = vpop.f32.mrf.mxu0
    %v962 = vadd.f32 0.0, %v961
    %963 = vdwg.mxu0
    %v964 = vadd.f32 %v940, %v962
    %v965 = vadd.f32 %v964, %v31
    %966 = vst.msk [vmem:[#allocation2 + $0x1] sm:$0x1] %vm548, %v965
    // Predicated region
    $region26: #{tpu_custom_call.1} parent=1 // pred_check
      _
    $region27: #{tpu_custom_call.1} parent=1 // pred_check_branch
      %968 = sbr.rel (0) target = $region29
    $region28: #{tpu_custom_call.1} parent=1 // pred_region
      %970 = vsyncadd [#allocation3], 0
      %s972 = sshll.u32 [#allocation2], 4
      %s973 = int_to_ptr.vmem [resolvable:$true] %s972
      %s974 = sshll.u32 %s6, 4
      %s975 = int_to_ptr.hbm [resolvable:$true] %s974
      %977 = dma.vmem_to_hbm [thread:$0]  %s973, 32, %s975, [#allocation3]
    $region29: #{tpu_custom_call.1} parent=1 // pred_fallthru
      _
    // Predicated region
    $region30: #{tpu_custom_call.1} parent=1 // pred_check
      _
    $region31: #{tpu_custom_call.1} parent=1 // pred_check_branch
      %979 = sbr.rel (0) target = $region33
    $region32: #{tpu_custom_call.1} parent=1 // pred_region
      %981 = dma.done [#allocation3], 32
    $region33: #{tpu_custom_call.1} parent=1 // pred_fallthru
      _
    %982 = vsyncpa [#allocation3], 1

</llo_original>
